<compile_context>
chip_gen: v7x
topology: tpu7x:2x2x1
jax: 0.10.0
libtpu: 0.0.40
codegen_flags: <defaults>
</compile_context>

<pallas_src>
import jax
import jax.numpy as jnp
from jax.experimental import pallas as pl
from jax.experimental.pallas import tpu as pltpu

_LANE = 128
_SUBLANE = 8
_MIN_TM_BEFORE_K_TILING = 256


# --------------------------------------------------------------------------- #
# Kernels
# --------------------------------------------------------------------------- #
def _linear_kernel(x_ref, w_ref, b_ref, o_ref):
    # x_ref: (tm, F), w_ref: (F, C_pad) -> MXU-native [M,K]x[K,N], f32 acc.
    acc = jnp.dot(x_ref[...], w_ref[...], preferred_element_type=jnp.float32)
    o_ref[...] = (acc + b_ref[...]).astype(o_ref.dtype)


def _linear_kernel_ktiled(x_ref, w_ref, b_ref, o_ref, acc_ref):
    # x_ref: (tm, tk), w_ref: (tk, C_pad); accumulate over the trailing K axis.
    k = pl.program_id(1)

    @pl.when(k == 0)
    def _():
        acc_ref[...] = jnp.zeros_like(acc_ref)

    acc_ref[...] += jnp.dot(x_ref[...], w_ref[...],
                            preferred_element_type=jnp.float32)

    @pl.when(k == pl.num_programs(1) - 1)
    def _():
        o_ref[...] = (acc_ref[...] + b_ref[...]).astype(o_ref.dtype)


# --------------------------------------------------------------------------- #
# Init-time parameter packing
# --------------------------------------------------------------------------- #
def prepare_params(weight, bias, *, lane=_LANE, param_dtype=jnp.float32):
    """One-time packing of nn.Linear params.

    weight: [C, F] (PyTorch convention), bias: [C].
    Returns (w_t, b_p) with w_t: [F, C_pad] (pre-transposed, optionally bf16)
    and b_p: [1, C_pad] (f32).  C_pad is a multiple of 128 so the kernel's
    output stores are lane-dense unmasked stores.
    """
    C, F = weight.shape
    c_pad = max(lane, ((C + lane - 1) // lane) * lane)
    w_t = jnp.pad(weight, ((0, c_pad - C), (0, 0))).T.astype(param_dtype)
    b_p = jnp.pad(bias, (0, c_pad - C)).astype(jnp.float32).reshape(1, c_pad)
    return w_t, b_p


# --------------------------------------------------------------------------- #
# Tiling / VMEM budget helpers
# --------------------------------------------------------------------------- #
def _round_up(x, m):
    return ((x + m - 1) // m) * m


def _vmem_budget_bytes():
    """Chip-aware VMEM budget (~78% of per-core capacity)."""
    phys = 64 << 20  # conservative default = v7x per-TensorCore capacity
    try:
        info = pltpu.get_tpu_info()
        phys = int(getattr(info, "vmem_capacity_bytes", phys)) or phys
    except Exception:
        pass
    return int(phys * 0.78)


def _select_tiling(B, F, C_pad, x_bytes, w_bytes, out_bytes,
                   tm_req, budget, max_tk):
    """Pick (mode, tm, tk).  mode is 'simple' (weight VMEM-resident) or
    'ktiled' (stream weight over a trailing K grid axis)."""

    # Honest budget: streamed operands are double-buffered AND the constant-
    # index-map weight/bias may also occupy 2 pipeline buffers each.
    def simple_bytes(tm):
        return (2 * tm * F * x_bytes + 2 * tm * C_pad * out_bytes
                + 2 * F * C_pad * w_bytes + 2 * _SUBLANE * C_pad * 4)

    def ktiled_bytes(tm, tk):
        return (2 * tm * tk * x_bytes + 2 * tk * C_pad * w_bytes
                + 2 * tm * C_pad * out_bytes + tm * C_pad * 4
                + 2 * _SUBLANE * C_pad * 4)

    tm = max(_SUBLANE, min(_round_up(tm_req, _SUBLANE), _round_up(B, _SUBLANE)))

    # v7x megacore: if the batch supports two >=256-row tiles, cap tm so the
    # "parallel" batch axis has at least 2 grid steps (one per TensorCore).
    if B >= 2 * 256:
        tm = min(tm, max(256, _round_up(pl.cdiv(B, 2), 256)))

    k_tiling_ok = (F % _LANE == 0) and (F > _LANE)
    force_k = k_tiling_ok and (max_tk is not None) and (max_tk < F)

    if not force_k:
        t = tm
        floor = min(tm, _MIN_TM_BEFORE_K_TILING)
        while t > floor and simple_bytes(t) > budget:
            t = max(floor, _round_up(t // 2, _SUBLANE))
        if simple_bytes(t) <= budget:
            return "simple", t, F
        if not k_tiling_ok:
            # TODO(synk): K-tiling needs F % 128 == 0; shrink tm instead.
            while t > _SUBLANE and simple_bytes(t) > budget:
                t = max(_SUBLANE, _round_up(t // 2, _SUBLANE))
            return "simple", t, F
        tm = t

    # K-tiled: largest multiple-of-128 divisor of F (<= max_tk) that fits.
    tk_cap = F if max_tk is None else max(_LANE, (max_tk // _LANE) * _LANE)
    best = _LANE
    d = _LANE
    while d <= min(F, tk_cap):
        if F % d == 0:
            best = d
        d += _LANE
    tk = best
    while tk > _LANE and ktiled_bytes(tm, tk) > budget:
        nxt = tk - _LANE
        while nxt > _LANE and F % nxt != 0:
            nxt -= _LANE
        tk = nxt
    while tm > _SUBLANE and ktiled_bytes(tm, tk) > budget:
        tm = max(_SUBLANE, _round_up(tm // 2, _SUBLANE))
    return "ktiled", tm, tk


# --------------------------------------------------------------------------- #
# Forward wrapper
# --------------------------------------------------------------------------- #
def logistic_regression_forward(x, w_t, b_padded, num_classes, *,
                                tm=512, compute_dtype=None, max_tk=None,
                                min_rows_for_pallas=0):
    """Equivalent of nn.Linear(num_features, num_classes)(x).

    x:        [B, F]
    w_t:      [F, C_pad]  (from prepare_params; C_pad multiple of 128)
    b_padded: [1, C_pad]  (f32)
    compute_dtype: optional (e.g. jnp.bfloat16) cast of x at the call boundary;
                   accumulation stays f32, output keeps x's original dtype.
    max_tk:   optional cap on the contraction tile (mainly for testing the
              K-tiled path).
    returns   [B, num_classes]
    """
    B, F = x.shape
    Fw, C_pad = w_t.shape
    assert F == Fw, f"feature mismatch: x has {F}, weight has {Fw}"
    out_dtype = x.dtype

    if B < min_rows_for_pallas:
        # Tiny problems: pallas_call fixed overhead dominates; plain XLA wins.
        out = x.astype(jnp.float32) @ w_t.astype(jnp.float32) + b_padded[0]
        return out[:, :num_classes].astype(out_dtype)

    x_in = x if compute_dtype is None else x.astype(compute_dtype)

    x_bytes = jnp.dtype(x_in.dtype).itemsize
    w_bytes = jnp.dtype(w_t.dtype).itemsize
    out_bytes = jnp.dtype(out_dtype).itemsize

    budget = _vmem_budget_bytes()
    mode, tm_eff, tk = _select_tiling(B, F, C_pad, x_bytes, w_bytes, out_bytes,
                                      tm, budget, max_tk)

    grid_b = pl.cdiv(B, tm_eff)
    # v7x load balance: prefer an even number of batch grid steps.
    if grid_b > 1 and grid_b % 2 == 1:
        tm_alt = _round_up(pl.cdiv(B, grid_b + 1), _SUBLANE)
        if tm_alt >= _SUBLANE and pl.cdiv(B, tm_alt) % 2 == 0:
            tm_eff = tm_alt
            grid_b = pl.cdiv(B, tm_eff)

    cost = pl.CostEstimate(
        flops=2 * B * F * C_pad,
        transcendentals=0,
        bytes_accessed=(B * F * x_bytes + F * C_pad * w_bytes
                        + B * C_pad * out_bytes),
    )

    if mode == "simple":
        grid = (grid_b,)
        in_specs = [
            pl.BlockSpec((tm_eff, F), lambda i: (i, 0)),      # streamed x tiles
            pl.BlockSpec((F, C_pad), lambda i: (0, 0)),       # resident weight
            pl.BlockSpec((1, C_pad), lambda i: (0, 0)),       # resident bias
        ]
        out_specs = pl.BlockSpec((tm_eff, C_pad), lambda i: (i, 0))
        scratch = []
        kernel = _linear_kernel
        dim_sem = ("parallel",)
        need = (2 * tm_eff * F * x_bytes + 2 * tm_eff * C_pad * out_bytes
                + 2 * F * C_pad * w_bytes + 2 * _SUBLANE * C_pad * 4)
    else:
        grid_k = F // tk
        grid = (grid_b, grid_k)
        in_specs = [
            pl.BlockSpec((tm_eff, tk), lambda i, k: (i, k)),  # x tiles
            pl.BlockSpec((tk, C_pad), lambda i, k: (k, 0)),   # streamed weight
            pl.BlockSpec((1, C_pad), lambda i, k: (0, 0)),    # resident bias
        ]
        out_specs = pl.BlockSpec((tm_eff, C_pad), lambda i, k: (i, 0))
        scratch = [pltpu.VMEM((tm_eff, C_pad), jnp.float32)]
        kernel = _linear_kernel_ktiled
        dim_sem = ("parallel", "arbitrary")
        need = (2 * tm_eff * tk * x_bytes + 2 * tk * C_pad * w_bytes
                + 2 * tm_eff * C_pad * out_bytes + tm_eff * C_pad * 4
                + 2 * _SUBLANE * C_pad * 4)

    vmem_limit = int(min(max(budget, 32 << 20),
                         max(need + (4 << 20), 24 << 20)))

    out = pl.pallas_call(
        kernel,
        out_shape=jax.ShapeDtypeStruct((B, C_pad), out_dtype),
        grid_spec=pltpu.PrefetchScalarGridSpec(
            num_scalar_prefetch=0,
            grid=grid,
            in_specs=in_specs,
            out_specs=out_specs,
            scratch_shapes=scratch,
        ),
        compiler_params=pltpu.CompilerParams(
            dimension_semantics=dim_sem,
            vmem_limit_bytes=vmem_limit,
        ),
        cost_estimate=cost,
    )(x_in, w_t, b_padded)

    if C_pad == num_classes:
        return out
    return out[:, :num_classes]


# --------------------------------------------------------------------------- #
# Self-test
# --------------------------------------------------------------------------- #
if __name__ == "__main__":
    key = jax.random.PRNGKey(0)

    def make_problem(key, batch, num_features, num_classes):
        kx, kw, kb = jax.random.split(key, 3)
        x = jax.random.normal(kx, (batch, num_features), dtype=jnp.float32)
        bound = 1.0 / (num_features ** 0.5)
        weight = jax.random.uniform(kw, (num_classes, num_features),
                                    dtype=jnp.float32,
                                    minval=-bound, maxval=bound)
        bias = jax.random.uniform(kb, (num_classes,), dtype=jnp.float32,
                                  minval=-bound, maxval=bound)
        return x, weight, bias

    # ---- Test 1: simple path, small batch (module-consistent shapes) ------- #
    k1, k2, k3, k4 = jax.random.split(key, 4)
    x, weight, bias = make_problem(k1, batch=8, num_features=32, num_classes=16)
    w_t, b_p = prepare_params(weight, bias)
    out = logistic_regression_forward(x, w_t, b_p, 16)
    jax.block_until_ready(out)
    ref = x @ weight.T + bias
    assert out.shape == (8, 16)
    assert jnp.allclose(out, ref, atol=1e-5, rtol=1e-5)

    # ---- Test 2: K-tiled path (forced via max_tk) --------------------------- #
    x, weight, bias = make_problem(k2, batch=16, num_features=256,
                                   num_classes=16)
    w_t, b_p = prepare_params(weight, bias)
    out = logistic_regression_forward(x, w_t, b_p, 16, max_tk=128)
    jax.block_until_ready(out)
    ref = x @ weight.T + bias
    assert out.shape == (16, 16)
    assert jnp.allclose(out, ref, atol=1e-5, rtol=1e-5)

    # ---- Test 3: ragged last batch tile (no host-side padding of x) -------- #
    x, weight, bias = make_problem(k3, batch=20, num_features=32, num_classes=5)
    w_t, b_p = prepare_params(weight, bias)
    out = logistic_regression_forward(x, w_t, b_p, 5, tm=8)
    jax.block_until_ready(out)
    ref = x @ weight.T + bias
    assert out.shape == (20, 5)
    assert jnp.allclose(out, ref, atol=1e-5, rtol=1e-5)

    # ---- Test 4: opt-in bf16 params/activations, f32 accumulation ---------- #
    x, weight, bias = make_problem(k4, batch=16, num_features=128,
                                   num_classes=16)
    w_t, b_p = prepare_params(weight, bias, param_dtype=jnp.bfloat16)
    out = logistic_regression_forward(x, w_t, b_p, 16,
                                      compute_dtype=jnp.bfloat16)
    jax.block_until_ready(out)
    ref = x @ weight.T + bias
    assert out.shape == (16, 16) and out.dtype == jnp.float32
    assert jnp.allclose(out, ref, atol=5e-2, rtol=5e-2)

    print("KERNEL_OK")
</pallas_src>

<mosaic_0001>
module attributes {stable_mosaic.version = 11 : i64} {
  func.func @_linear_kernel(%arg0: i32, %arg1: memref<8x32xf32, #tpu.memory_space<vmem>>, %arg2: memref<32x128xf32, #tpu.memory_space<vmem>>, %arg3: memref<1x128xf32, #tpu.memory_space<vmem>>, %arg4: memref<8x128xf32, #tpu.memory_space<vmem>>) attributes {dimension_semantics = [#tpu.dimension_semantics<parallel>], iteration_bounds = array<i64: 1>, scalar_prefetch = 0 : i64, scratch_operands = 0 : i64, tpu.core_type = #tpu.core_type<tc>, window_params = [{transform_indices = @transform_0, window_bounds = array<i64: 8, 32>}, {pipeline_mode = #tpu.pipeline_mode<synchronous>, transform_indices = @transform_1, window_bounds = array<i64: 32, 128>}, {pipeline_mode = #tpu.pipeline_mode<synchronous>, transform_indices = @transform_2, window_bounds = array<i64: 1, 128>}, {transform_indices = @transform_3, window_bounds = array<i64: 8, 128>}]} {
    %c0 = arith.constant 0 : index
    %c0_0 = arith.constant 0 : index
    %0 = vector.load %arg1[%c0, %c0_0] : memref<8x32xf32, #tpu.memory_space<vmem>>, vector<8x32xf32>
    %c0_1 = arith.constant 0 : index
    %c0_2 = arith.constant 0 : index
    %1 = vector.load %arg2[%c0_1, %c0_2] : memref<32x128xf32, #tpu.memory_space<vmem>>, vector<32x128xf32>
    %cst = arith.constant dense<0.000000e+00> : vector<8x128xf32>
    %2 = tpu.matmul %0, %1, %cst {dimension_numbers = #tpu.dot_dimension_numbers<[1], [0], [0], [1], [0, 0, 1, 1], [], []>} : vector<8x32xf32>, vector<32x128xf32>, vector<8x128xf32> -> vector<8x128xf32>
    %c0_3 = arith.constant 0 : index
    %c0_4 = arith.constant 0 : index
    %3 = vector.load %arg3[%c0_3, %c0_4] : memref<1x128xf32, #tpu.memory_space<vmem>>, vector<1x128xf32>
    %4 = vector.broadcast %3 : vector<1x128xf32> to vector<8x128xf32>
    %5 = arith.addf %2, %4 : vector<8x128xf32>
    %c0_5 = arith.constant 0 : index
    %c0_6 = arith.constant 0 : index
    %6 = vector.load %arg4[%c0_5, %c0_6] : memref<8x128xf32, #tpu.memory_space<vmem>>, vector<8x128xf32>
    tpu.vector_store %arg4[%c0_5, %c0_6], %5 {strides = array<i32>} : memref<8x128xf32, #tpu.memory_space<vmem>>, vector<8x128xf32>,
    return
  }
  func.func @transform_0(%arg0: i32) -> (i32, i32) {
    %c0_i32 = arith.constant 0 : i32
    %c0_i32_0 = arith.constant 0 : i32
    return %arg0, %c0_i32 : i32, i32
  }
  func.func @transform_1(%arg0: i32) -> (i32, i32) {
    %c0_i32 = arith.constant 0 : i32
    %c0_i32_0 = arith.constant 0 : i32
    %c0_i32_1 = arith.constant 0 : i32
    return %c0_i32, %c0_i32_0 : i32, i32
  }
  func.func @transform_2(%arg0: i32) -> (i32, i32) {
    %c0_i32 = arith.constant 0 : i32
    %c0_i32_0 = arith.constant 0 : i32
    %c0_i32_1 = arith.constant 0 : i32
    return %c0_i32, %c0_i32_0 : i32, i32
  }
  func.func @transform_3(%arg0: i32) -> (i32, i32) {
    %c0_i32 = arith.constant 0 : i32
    %c0_i32_0 = arith.constant 0 : i32
    return %arg0, %c0_i32 : i32, i32
  }
}

</mosaic_0001>

<llo_original>
// kernel: tpu_custom_call.1
$region0: #{tpu_custom_call.1}
  #allocation0 [shape = 'u32[]', space=smem, size = 0x4, offset = 0x4, fixed_abs, tag = 'smem constant byte address 0x4 - core index']
  #allocation1 [shape = 'u32[144,128]{1,0:T(1,128)}', space=vmem, size = 0x12000, scoped, tag = 'internal scratch']
  %s0 = inlined_call_operand.hbm [shape: f32[8,32], index: 0, kind: input, shape index: {}]
  %s1 = inlined_call_operand.hbm [shape: f32[32,128], index: 1, kind: input, shape index: {}]
  %s2 = inlined_call_operand.vmem [shape: f32[1,128], index: 2, kind: input, shape index: {}]
  %s3 = inlined_call_operand.hbm [shape: f32[8,128], index: 3, kind: output, shape index: {}]
  %s4 = sld [smem:[#allocation0]]
  $region30: #{tpu_custom_call.1} parent=0
    _
  %s6 = ssub.s32 1, %s4
  %s7 = scalar_select 0, %s6, %s4
  $region1: #{tpu_custom_call.1} parent=0
    #allocation2 [shape = 'u8[4096]{0}', space=vmem, size = 0x1000, scoped, tag = 'input window, operand 0, single buffered']
    #allocation3 [shape = 's32[1]{0}', space=sflag, size = 0x4, scoped, tag = 'scoped memory for tpu_custom_call.1']
    #allocation4 [shape = 's32[1]{0}', space=sflag, size = 0x4, scoped, tag = 'scoped memory for tpu_custom_call.1']
    #allocation5 [shape = 'u8[16384]{0}', space=vmem, size = 0x4000, scoped, tag = 'input window, operand 1, single buffered']
    #allocation6 [shape = 's32[1]{0}', space=sflag, size = 0x4, scoped, tag = 'scoped memory for tpu_custom_call.1']
    #allocation7 [shape = 'u8[4096]{0}', space=vmem, size = 0x1000, scoped, tag = 'output window, operand 0, single buffered']
    %8 = vsyncpa [#allocation3], 0
    %9 = vsyncpa [#allocation6], 0
    %10 = vsyncpa [#allocation4], 0
    // Predicated region
    $region2: #{tpu_custom_call.1} parent=1 // pred_check
      _
    $region3: #{tpu_custom_call.1} parent=1 // pred_check_branch
      %12 = sbr.rel (0) target = $region5
    $region4: #{tpu_custom_call.1} parent=1 // pred_region
      %s14 = ssub.s32 128, 128
      %15 = vsyncadd [#allocation3], %s14
      %s17 = sshll.u32 [#allocation2], 4
      %s18 = int_to_ptr.vmem [resolvable:$true] %s17
      %20 = dma.hbm_to_vmem [thread:$0]  %s0, 128, %s18, [#allocation3]
    $region5: #{tpu_custom_call.1} parent=1 // pred_fallthru
      _
    // Predicated region
    $region6: #{tpu_custom_call.1} parent=1 // pred_check
      _
    $region7: #{tpu_custom_call.1} parent=1 // pred_check_branch
      %22 = sbr.rel (0) target = $region9
    $region8: #{tpu_custom_call.1} parent=1 // pred_region
      %s24 = ssub.s32 512, 512
      %25 = vsyncadd [#allocation6], %s24
      %s26 = sshll.u32 [#allocation5], 4
      %s27 = int_to_ptr.vmem [resolvable:$true] %s26
      %32 = dma.hbm_to_vmem [thread:$0]  %s1, 512, %s27, [#allocation6], 128, 128, 8
    $region9: #{tpu_custom_call.1} parent=1 // pred_fallthru
      _
    // Predicated region
    $region10: #{tpu_custom_call.1} parent=1 // pred_check
      _
    $region11: #{tpu_custom_call.1} parent=1 // pred_check_branch
      %34 = sbr.rel (0) target = $region13
    $region12: #{tpu_custom_call.1} parent=1 // pred_region
      _
    $region13: #{tpu_custom_call.1} parent=1 // pred_fallthru
      _
    // Predicated region
    $region14: #{tpu_custom_call.1} parent=1 // pred_check
      _
    $region15: #{tpu_custom_call.1} parent=1 // pred_check_branch
      %36 = sbr.rel (0) target = $region17
    $region16: #{tpu_custom_call.1} parent=1 // pred_region
      %37 = dma.done [#allocation3], 128
    $region17: #{tpu_custom_call.1} parent=1 // pred_fallthru
      _
    // Predicated region
    $region18: #{tpu_custom_call.1} parent=1 // pred_check
      _
    $region19: #{tpu_custom_call.1} parent=1 // pred_check_branch
      %39 = sbr.rel (0) target = $region21
    $region20: #{tpu_custom_call.1} parent=1 // pred_region
      %40 = dma.done [#allocation6], 512
    $region21: #{tpu_custom_call.1} parent=1 // pred_fallthru
      _
    %v41 = vld [vmem:[#allocation2] sm:$0xff]
    %v42 = vld [vmem:[#allocation5] sm:$0xff]
    %v43 = vld [vmem:[#allocation5 + $0x8] sm:$0xff]
    %v44 = vld [vmem:[#allocation5 + $0x10] sm:$0xff]
    %v45 = vld [vmem:[#allocation5 + $0x18] sm:$0xff]
    %v46 = vld [vmem:[%s2] sm:$0x1]
    %v48 = vlaneseq
    %v49 = vshrl.u32 %v48, 7
    %v50 = vsub.s32 0, %v49
    %v51 = vrot.slane %v46, %v50
    %vm53 = vcmask 261120
    %v55 = vsel %vm53, %v41, 0
    %57 = vmatprep.subr.mxu0 0.0
    %58 = vmatpush1.msra.mxu0 %v42
    %59 = vmatprep.subr.mxu0 0.0
    %60 = vmatpush1.msra.mxu0 %v43
    %61 = vmatprep.subr.mxu0 0.0
    %62 = vmatpush1.msra.mxu0 %v44
    %63 = vmatprep.subr.mxu0 0.0
    %64 = vmatpush1.msra.mxu0 %v45
    %65 = vmatprep.subr.mxu0 0.0
    %66 = vmatpush1.msra.mxu0 0.0
    %67 = vmatprep.subr.mxu0 0.0
    %68 = vmatpush1.msra.mxu0 0.0
    %69 = vmatprep.subr.mxu0 0.0
    %70 = vmatpush1.msra.mxu0 0.0
    %71 = vmatprep.subr.mxu0 0.0
    %72 = vmatpush1.msra.mxu0 0.0
    %73 = vmatprep.subr.mxu0 0.0
    %74 = vmatpush1.msra.mxu0 0.0
    %75 = vmatprep.subr.mxu0 0.0
    %76 = vmatpush1.msra.mxu0 0.0
    %77 = vmatprep.subr.mxu0 0.0
    %78 = vmatpush1.msra.mxu0 0.0
    %79 = vmatprep.subr.mxu0 0.0
    %80 = vmatpush1.msra.mxu0 0.0
    %81 = vmatprep.subr.mxu0 0.0
    %82 = vmatpush1.msra.mxu0 0.0
    %83 = vmatprep.subr.mxu0 0.0
    %84 = vmatpush1.msra.mxu0 0.0
    %85 = vmatprep.subr.mxu0 0.0
    %86 = vmatpush1.msra.mxu0 0.0
    %87 = vmatprep.subr.mxu0 0.0
    %88 = vmatpush1.msra.mxu0 0.0
    %89 = vmatprep.subr.mxu0 0.0
    %90 = vmatpush1.msra.mxu0 0.0
    %91 = vmatprep.subr.mxu0 0.0
    %92 = vmatpush1.msra.mxu0 0.0
    %93 = vmatprep.subr.mxu0 0.0
    %94 = vmatpush1.msra.mxu0 0.0
    %95 = vmatprep.subr.mxu0 0.0
    %96 = vmatpush1.msra.mxu0 0.0
    %97 = vmatprep.subr.mxu0 0.0
    %98 = vmatpush1.msra.mxu0 0.0
    %99 = vmatprep.subr.mxu0 0.0
    %100 = vmatpush1.msra.mxu0 0.0
    %101 = vmatprep.subr.mxu0 0.0
    %102 = vmatpush1.msra.mxu0 0.0
    %103 = vmatprep.subr.mxu0 0.0
    %104 = vmatpush1.msra.mxu0 0.0
    %105 = vmatprep.subr.mxu0 0.0
    %106 = vmatpush1.msra.mxu0 0.0
    %107 = vmatprep.subr.mxu0 0.0
    %108 = vmatpush1.msra.mxu0 0.0
    %109 = vmatprep.subr.mxu0 0.0
    %110 = vmatpush1.msra.mxu0 0.0
    %111 = vmatprep.subr.mxu0 0.0
    %112 = vmatpush1.msra.mxu0 0.0
    %113 = vmatprep.subr.mxu0 0.0
    %114 = vmatpush1.msra.mxu0 0.0
    %115 = vmatprep.subr.mxu0 0.0
    %116 = vmatpush1.msra.mxu0 0.0
    %117 = vmatprep.subr.mxu0 0.0
    %118 = vmatpush1.msra.mxu0 0.0
    %119 = vmatprep.subr.mxu0 0.0
    %120 = vmatpush1.msra.mxu0 0.0
    %121 = vmatprep.mubr.f32.mxu0 0.0
    %122 = vmatmul.mubr.f32.gmra.mrb[0].mxu0 %v55
    %v123 = vpop.f32.mrb[0].mxu0
    %v124 = vadd.f32 %v51, %v123
    %v125 = vpop.f32.mrb[0].mxu0
    %126 = vdwg.mxu0
    %127 = vst [vmem:[#allocation7] sm:$0xff] %v124
    // Predicated region
    $region22: #{tpu_custom_call.1} parent=1 // pred_check
      _
    $region23: #{tpu_custom_call.1} parent=1 // pred_check_branch
      %129 = sbr.rel (0) target = $region25
    $region24: #{tpu_custom_call.1} parent=1 // pred_region
      %s131 = ssub.s32 128, 128
      %132 = vsyncadd [#allocation4], %s131
      %s134 = sshll.u32 [#allocation7], 4
      %s135 = int_to_ptr.vmem [resolvable:$true] %s134
      %137 = dma.vmem_to_hbm [thread:$0]  %s135, 128, %s3, [#allocation4]
    $region25: #{tpu_custom_call.1} parent=1 // pred_fallthru
      _
    // Predicated region
    $region26: #{tpu_custom_call.1} parent=1 // pred_check
      _
    $region27: #{tpu_custom_call.1} parent=1 // pred_check_branch
      %139 = sbr.rel (0) target = $region29
    $region28: #{tpu_custom_call.1} parent=1 // pred_region
      %140 = dma.done [#allocation4], 128
    $region29: #{tpu_custom_call.1} parent=1 // pred_fallthru
      _
    %141 = vsyncpa [#allocation3], 1
    %142 = vsyncpa [#allocation6], 1
    %143 = vsyncpa [#allocation4], 1

</llo_original>
